<compile_context>
chip_gen: v7x
topology: tpu7x:2x2x1
jax: 0.10.0
libtpu: 0.0.40
codegen_flags: <defaults>
</compile_context>

<pallas_src>
import jax
import jax.numpy as jnp
from jax.experimental import pallas as pl
from jax.experimental.pallas import tpu as pltpu


def _make_cutouts_kernel(xw_ref, facs_ref, noise_ref, out_ref):
    # xw_ref:    (K, L)     pooling windows: sublane axis = window element
    #                       (K = kh*kw), lane axis = flattened output position
    #                       L = C*cs*cs (lane-dense).
    # facs_ref:  (cutn, 1)  per-cutout noise scale (lane-broadcast).
    # noise_ref: (cutn, L)  per-cutout gaussian noise.
    # out_ref:   (cutn, L)
    xw = xw_ref[...]
    k = xw_ref.shape[0]
    # (avg + max) / 2 with the mean's divide folded into the final scale
    # (constants folded at trace time).
    pooled = (jnp.sum(xw, axis=0, keepdims=True) * (0.5 / k)
              + jnp.max(xw, axis=0, keepdims=True) * 0.5)            # (1, L)
    # Single fused broadcast-add for all cutouts.
    out_ref[...] = pooled + facs_ref[...] * noise_ref[...]            # (cutn, L)


class MakeCutoutsPallas:
    def __init__(self, cut_size, cutn, clip_view=None):
        self.cut_size = cut_size
        self.cutn = cutn
        self.clip_view = clip_view
        self.cutn_zoom = int(2 * cutn / 3)   # kept for parity; augs not ported
        self.noise_fac = 0.1

    def __call__(self, x, key):
        # x: (1, C, H, W) float32. The original module only supports batch == 1
        # because facs has leading dim cutn.
        n, c, h, w = x.shape
        assert n == 1, "MakeCutouts noise broadcast requires batch == 1"
        cs = self.cut_size
        # TODO(synk): general adaptive pooling (non-divisible H/W) not ported;
        # uniform pooling requires divisibility.
        assert h % cs == 0 and w % cs == 0, \
            "adaptive pooling reduces to uniform pooling only when divisible"
        kh, kw = h // cs, w // cs
        k_win = kh * kw
        lanes = c * cs * cs

        # Layout plumbing only (no math): window elements on the sublane axis,
        # flattened (c, i, j) output positions on the lane axis.
        xw = (x[0].astype(jnp.float32)
              .reshape(c, cs, kh, cs, kw)
              .transpose(2, 4, 0, 1, 3)          # (kh, kw, c, cs, cs)
              .reshape(k_win, lanes))

        k1, k2 = jax.random.split(key)
        facs = jax.random.uniform(k1, (self.cutn, 1), dtype=jnp.float32,
                                  minval=0.0, maxval=self.noise_fac)
        noise = jax.random.normal(k2, (self.cutn, c, cs, cs), dtype=jnp.float32)

        out = pl.pallas_call(
            _make_cutouts_kernel,
            out_shape=jax.ShapeDtypeStruct((self.cutn, lanes), jnp.float32),
            grid_spec=pl.GridSpec(
                grid=(1,),                       # collapsed grid: one invocation
                in_specs=[
                    pl.BlockSpec((k_win, lanes), lambda i: (0, 0)),
                    pl.BlockSpec((self.cutn, 1), lambda i: (0, 0)),
                    pl.BlockSpec((self.cutn, lanes), lambda i: (0, 0)),
                ],
                out_specs=pl.BlockSpec((self.cutn, lanes), lambda i: (0, 0)),
            ),
            compiler_params=pltpu.CompilerParams(
                dimension_semantics=("arbitrary",),
                vmem_limit_bytes=64 << 20,
            ),
        )(xw, facs, noise.reshape(self.cutn, lanes))

        batch = out.reshape(self.cutn, c, cs, cs)   # NCHW like the original
        return batch, facs, noise


if __name__ == "__main__":
    key = jax.random.PRNGKey(0)
    k_in, k_noise = jax.random.split(key)

    cut_size, cutn = 8, 6
    C, H, W = 4, 16, 16
    x = jax.random.normal(k_in, (1, C, H, W), dtype=jnp.float32)

    mod = MakeCutoutsPallas(cut_size, cutn)
    batch, facs, noise = mod(x, k_noise)
    batch = jax.block_until_ready(batch)

    # Pure-JAX reference of the implemented semantics.
    kh, kw = H // cut_size, W // cut_size
    xwin = (x[0]
            .reshape(C, cut_size, kh, cut_size, kw)
            .transpose(0, 1, 3, 2, 4)
            .reshape(C, cut_size, cut_size, kh * kw))
    pooled = (xwin.mean(-1) + xwin.max(-1)) * 0.5                 # (C, cs, cs)
    ref = pooled[None] + facs[:, :, None, None] * noise           # (cutn, C, cs, cs)

    assert batch.shape == (cutn, C, cut_size, cut_size)
    assert jnp.allclose(batch, ref, atol=1e-5, rtol=1e-5)

    print("KERNEL_OK")
</pallas_src>

<mosaic_0001>
module attributes {stable_mosaic.version = 11 : i64} {
  func.func @_make_cutouts_kernel(%arg0: i32, %arg1: memref<4x256xf32, #tpu.memory_space<vmem>>, %arg2: memref<6x1xf32, #tpu.memory_space<vmem>>, %arg3: memref<6x256xf32, #tpu.memory_space<vmem>>, %arg4: memref<6x256xf32, #tpu.memory_space<vmem>>) attributes {dimension_semantics = [#tpu.dimension_semantics<arbitrary>], iteration_bounds = array<i64: 1>, scalar_prefetch = 0 : i64, scratch_operands = 0 : i64, tpu.core_type = #tpu.core_type<tc>, window_params = [{pipeline_mode = #tpu.pipeline_mode<synchronous>, transform_indices = @transform_0, window_bounds = array<i64: 4, 256>}, {pipeline_mode = #tpu.pipeline_mode<synchronous>, transform_indices = @transform_1, window_bounds = array<i64: 6, 1>}, {pipeline_mode = #tpu.pipeline_mode<synchronous>, transform_indices = @transform_2, window_bounds = array<i64: 6, 256>}, {pipeline_mode = #tpu.pipeline_mode<synchronous>, transform_indices = @transform_3, window_bounds = array<i64: 6, 256>}]} {
    %c0 = arith.constant 0 : index
    %c0_0 = arith.constant 0 : index
    %0 = vector.load %arg1[%c0, %c0_0] : memref<4x256xf32, #tpu.memory_space<vmem>>, vector<4x256xf32>
    %cst = arith.constant dense<0.000000e+00> : vector<256xf32>
    %1 = vector.multi_reduction <add>, %0, %cst [0] : vector<4x256xf32> to vector<256xf32>
    %2 = vector.shape_cast %1 : vector<256xf32> to vector<1x256xf32>
    %cst_1 = arith.constant 1.250000e-01 : f32
    %3 = vector.broadcast %cst_1 : f32 to vector<1x256xf32>
    %4 = arith.mulf %2, %3 : vector<1x256xf32>
    %cst_2 = arith.constant dense<0xFF800000> : vector<256xf32>
    %5 = vector.multi_reduction <maximumf>, %0, %cst_2 [0] : vector<4x256xf32> to vector<256xf32>
    %6 = vector.shape_cast %5 : vector<256xf32> to vector<1x256xf32>
    %cst_3 = arith.constant 5.000000e-01 : f32
    %7 = vector.broadcast %cst_3 : f32 to vector<1x256xf32>
    %8 = arith.mulf %6, %7 : vector<1x256xf32>
    %9 = arith.addf %4, %8 : vector<1x256xf32>
    %c0_4 = arith.constant 0 : index
    %c0_5 = arith.constant 0 : index
    %10 = vector.load %arg2[%c0_4, %c0_5] : memref<6x1xf32, #tpu.memory_space<vmem>>, vector<6x1xf32>
    %c0_6 = arith.constant 0 : index
    %c0_7 = arith.constant 0 : index
    %11 = vector.load %arg3[%c0_6, %c0_7] : memref<6x256xf32, #tpu.memory_space<vmem>>, vector<6x256xf32>
    %12 = vector.broadcast %10 : vector<6x1xf32> to vector<6x256xf32>
    %13 = arith.mulf %12, %11 : vector<6x256xf32>
    %14 = vector.broadcast %9 : vector<1x256xf32> to vector<6x256xf32>
    %15 = arith.addf %14, %13 : vector<6x256xf32>
    %c0_8 = arith.constant 0 : index
    %c0_9 = arith.constant 0 : index
    %16 = vector.load %arg4[%c0_8, %c0_9] : memref<6x256xf32, #tpu.memory_space<vmem>>, vector<6x256xf32>
    tpu.vector_store %arg4[%c0_8, %c0_9], %15 {strides = array<i32>} : memref<6x256xf32, #tpu.memory_space<vmem>>, vector<6x256xf32>,
    return
  }
  func.func @transform_0(%arg0: i32) -> (i32, i32) {
    %c0_i32 = arith.constant 0 : i32
    %c0_i32_0 = arith.constant 0 : i32
    %c0_i32_1 = arith.constant 0 : i32
    return %c0_i32, %c0_i32_0 : i32, i32
  }
  func.func @transform_1(%arg0: i32) -> (i32, i32) {
    %c0_i32 = arith.constant 0 : i32
    %c0_i32_0 = arith.constant 0 : i32
    %c0_i32_1 = arith.constant 0 : i32
    return %c0_i32, %c0_i32_0 : i32, i32
  }
  func.func @transform_2(%arg0: i32) -> (i32, i32) {
    %c0_i32 = arith.constant 0 : i32
    %c0_i32_0 = arith.constant 0 : i32
    %c0_i32_1 = arith.constant 0 : i32
    return %c0_i32, %c0_i32_0 : i32, i32
  }
  func.func @transform_3(%arg0: i32) -> (i32, i32) {
    %c0_i32 = arith.constant 0 : i32
    %c0_i32_0 = arith.constant 0 : i32
    %c0_i32_1 = arith.constant 0 : i32
    return %c0_i32, %c0_i32_0 : i32, i32
  }
}

</mosaic_0001>

<llo_original>
// kernel: tpu_custom_call.1
$region0: #{tpu_custom_call.1}
  #allocation0 [shape = 'u32[]', space=smem, size = 0x4, offset = 0x4, fixed_abs, tag = 'smem constant byte address 0x4 - core index']
  #allocation1 [shape = 'u32[144,128]{1,0:T(1,128)}', space=vmem, size = 0x12000, scoped, tag = 'internal scratch']
  %s0 = inlined_call_operand.hbm [shape: f32[4,256], index: 0, kind: input, shape index: {}]
  %s1 = inlined_call_operand.hbm [shape: f32[6,1], index: 1, kind: input, shape index: {}]
  %s2 = inlined_call_operand.hbm [shape: f32[6,256], index: 2, kind: input, shape index: {}]
  %s3 = inlined_call_operand.hbm [shape: f32[6,256], index: 3, kind: output, shape index: {}]
  %s4 = sld [smem:[#allocation0]]
  $region34: #{tpu_custom_call.1} parent=0
    _
  %s6 = ssub.s32 1, %s4
  %s7 = scalar_select 0, %s6, %s4
  $region1: #{tpu_custom_call.1} parent=0
    #allocation2 [shape = 'u8[4096]{0}', space=vmem, size = 0x1000, scoped, tag = 'input window, operand 0, single buffered']
    #allocation3 [shape = 's32[1]{0}', space=sflag, size = 0x4, scoped, tag = 'scoped memory for tpu_custom_call.1']
    #allocation4 [shape = 's32[1]{0}', space=sflag, size = 0x4, scoped, tag = 'scoped memory for tpu_custom_call.1']
    #allocation5 [shape = 'u8[4096]{0}', space=vmem, size = 0x1000, scoped, tag = 'input window, operand 1, single buffered']
    #allocation6 [shape = 's32[1]{0}', space=sflag, size = 0x4, scoped, tag = 'scoped memory for tpu_custom_call.1']
    #allocation7 [shape = 'u8[8192]{0}', space=vmem, size = 0x2000, scoped, tag = 'input window, operand 2, single buffered']
    #allocation8 [shape = 'u8[8192]{0}', space=vmem, size = 0x2000, scoped, tag = 'output window, operand 0, single buffered']
    %8 = vsyncpa [#allocation3], 0
    %9 = vsyncpa [#allocation6], 0
    %10 = vsyncpa [#allocation4], 0
    // Predicated region
    $region2: #{tpu_custom_call.1} parent=1 // pred_check
      _
    $region3: #{tpu_custom_call.1} parent=1 // pred_check_branch
      %12 = sbr.rel (0) target = $region5
    $region4: #{tpu_custom_call.1} parent=1 // pred_region
      %s14 = ssub.s32 128, 128
      %15 = vsyncadd [#allocation3], %s14
      %s17 = sshll.u32 [#allocation2], 4
      %s18 = int_to_ptr.vmem [resolvable:$true] %s17
      %20 = dma.hbm_to_vmem [thread:$0]  %s0, 128, %s18, [#allocation3]
    $region5: #{tpu_custom_call.1} parent=1 // pred_fallthru
      _
    // Predicated region
    $region6: #{tpu_custom_call.1} parent=1 // pred_check
      _
    $region7: #{tpu_custom_call.1} parent=1 // pred_check_branch
      %22 = sbr.rel (0) target = $region9
    $region8: #{tpu_custom_call.1} parent=1 // pred_region
      %s24 = ssub.s32 128, 128
      %25 = vsyncadd [#allocation6], %s24
      %s27 = sshll.u32 [#allocation5], 4
      %s28 = int_to_ptr.vmem [resolvable:$true] %s27
      %30 = dma.hbm_to_vmem [thread:$0]  %s1, 128, %s28, [#allocation6]
    $region9: #{tpu_custom_call.1} parent=1 // pred_fallthru
      _
    // Predicated region
    $region10: #{tpu_custom_call.1} parent=1 // pred_check
      _
    $region11: #{tpu_custom_call.1} parent=1 // pred_check_branch
      %32 = sbr.rel (0) target = $region13
    $region12: #{tpu_custom_call.1} parent=1 // pred_region
      %s34 = ssub.s32 256, 256
      %35 = vsyncadd [#allocation6], %s34
      %s37 = sshll.u32 [#allocation7], 4
      %s38 = int_to_ptr.vmem [resolvable:$true] %s37
      %40 = dma.hbm_to_vmem [thread:$0]  %s2, 256, %s38, [#allocation6]
    $region13: #{tpu_custom_call.1} parent=1 // pred_fallthru
      _
    // Predicated region
    $region14: #{tpu_custom_call.1} parent=1 // pred_check
      _
    $region15: #{tpu_custom_call.1} parent=1 // pred_check_branch
      %42 = sbr.rel (0) target = $region17
    $region16: #{tpu_custom_call.1} parent=1 // pred_region
      %43 = dma.done [#allocation3], 128
    $region17: #{tpu_custom_call.1} parent=1 // pred_fallthru
      _
    // Predicated region
    $region18: #{tpu_custom_call.1} parent=1 // pred_check
      _
    $region19: #{tpu_custom_call.1} parent=1 // pred_check_branch
      %45 = sbr.rel (0) target = $region21
    $region20: #{tpu_custom_call.1} parent=1 // pred_region
      %46 = dma.done [#allocation6], 128
    $region21: #{tpu_custom_call.1} parent=1 // pred_fallthru
      _
    // Predicated region
    $region22: #{tpu_custom_call.1} parent=1 // pred_check
      _
    $region23: #{tpu_custom_call.1} parent=1 // pred_check_branch
      %48 = sbr.rel (0) target = $region25
    $region24: #{tpu_custom_call.1} parent=1 // pred_region
      %49 = dma.done [#allocation6], 256
    $region25: #{tpu_custom_call.1} parent=1 // pred_fallthru
      _
    %v50 = vld [vmem:[#allocation2] sm:$0xff]
    %v52 = vcombine.high %v50, %v50
    %vm54 = vcmask 1043456
    %v55 = vsel %vm54, %v50, 0.0
    %v56 = vrot.slane %v55, 4
    %v57 = vadd.f32 %v55, %v56
    %v58 = vrot.slane %v57, 2
    %v59 = vadd.f32 %v57, %v58
    %v60 = vrot.slane %v59, 1
    %v61 = vadd.f32 %v59, %v60
    %v62 = vsel %vm54, %v52, 0.0
    %v63 = vrot.slane %v62, 4
    %v64 = vadd.f32 %v62, %v63
    %v65 = vrot.slane %v64, 2
    %v66 = vadd.f32 %v64, %v65
    %v67 = vrot.slane %v66, 1
    %v68 = vadd.f32 %v66, %v67
    %v69 = vmul.f32 %v61, 0.125
    %v70 = vmul.f32 %v68, 0.125
    %v71 = vsel %vm54, %v50, -inf
    %v72 = vrot.slane %v71, 4
    %v73 = vmax.f32 %v71, %v72
    %v74 = vrot.slane %v73, 2
    %v75 = vmax.f32 %v73, %v74
    %v76 = vrot.slane %v75, 1
    %v77 = vmax.f32 %v75, %v76
    %v78 = vsel %vm54, %v52, -inf
    %v79 = vrot.slane %v78, 4
    %v80 = vmax.f32 %v78, %v79
    %v81 = vrot.slane %v80, 2
    %v82 = vmax.f32 %v80, %v81
    %v83 = vrot.slane %v82, 1
    %v84 = vmax.f32 %v82, %v83
    %v85 = vmul.f32 %v77, 0.5
    %v86 = vmul.f32 %v84, 0.5
    %v87 = vadd.f32 %v69, %v85
    %v88 = vadd.f32 %v70, %v86
    %v89 = vld [vmem:[#allocation5] sm:$0x3f]
    %v90 = vld [vmem:[#allocation7] sm:$0x3f]
    %v91 = vld [vmem:[#allocation7 + $0x8] sm:$0x3f]
    %93 = vset.pattern.permute.xlu0 0
    %94 = vperm.xlu0 %93, %v89
    %v95 = vpop.permute.xlu0 %94
    %v97 = vmul.f32 %v95, %v90
    %v98 = vmul.f32 %v95, %v91
    %v99 = vadd.f32 %v87, %v97
    %v100 = vadd.f32 %v88, %v98
    %101 = vst [vmem:[#allocation8] sm:$0x3f] %v99
    %102 = vst [vmem:[#allocation8 + $0x8] sm:$0x3f] %v100
    // Predicated region
    $region26: #{tpu_custom_call.1} parent=1 // pred_check
      _
    $region27: #{tpu_custom_call.1} parent=1 // pred_check_branch
      %104 = sbr.rel (0) target = $region29
    $region28: #{tpu_custom_call.1} parent=1 // pred_region
      %s106 = ssub.s32 256, 256
      %107 = vsyncadd [#allocation4], %s106
      %s109 = sshll.u32 [#allocation8], 4
      %s110 = int_to_ptr.vmem [resolvable:$true] %s109
      %112 = dma.vmem_to_hbm [thread:$0]  %s110, 256, %s3, [#allocation4]
    $region29: #{tpu_custom_call.1} parent=1 // pred_fallthru
      _
    // Predicated region
    $region30: #{tpu_custom_call.1} parent=1 // pred_check
      _
    $region31: #{tpu_custom_call.1} parent=1 // pred_check_branch
      %114 = sbr.rel (0) target = $region33
    $region32: #{tpu_custom_call.1} parent=1 // pred_region
      %115 = dma.done [#allocation4], 256
    $region33: #{tpu_custom_call.1} parent=1 // pred_fallthru
      _
    %116 = vsyncpa [#allocation3], 1
    %117 = vsyncpa [#allocation6], 1
    %118 = vsyncpa [#allocation4], 1

</llo_original>
